<compile_context>
chip_gen: v7x
topology: tpu7x:2x2x1
jax: 0.10.0
libtpu: 0.0.40
codegen_flags: <defaults>
</compile_context>

<pallas_src>
import functools

import jax
import jax.numpy as jnp
from jax.experimental import pallas as pl
from jax.experimental.pallas import tpu as pltpu


def _focal_ce_partial_kernel(preds_ref, targets_ref, o_ref, acc_ref, *,
                             n_total, steps_per_split, use_mxu_reduce):
    step = pl.program_id(1)

    @pl.when(step == 0)
    def _init():
        acc_ref[0] = jnp.float32(0.0)

    logits = preds_ref[...].astype(jnp.float32)     # (TN, C), f32 compute
    tgt = targets_ref[...]                          # (TN, 1), int32
    tn, c = logits.shape

    # Numerically stable per-row cross entropy:
    #   ce = logsumexp(logits) - logits[target]
    #      = log(sum(exp(logits - max))) - (logits[target] - max)
    row_max = jnp.max(logits, axis=-1, keepdims=True)              # XLU
    shifted = logits - row_max                                     # VPU
    p = jnp.exp(shifted)                                           # EUP
    # (1, C) lane-id row broadcast against the (TN, 1) targets: avoids
    # re-materializing a (TN, C) iota every grid step (VALU trim for v7x).
    col_ids = jax.lax.broadcasted_iota(jnp.int32, (1, c), 1)
    masked = jnp.where(col_ids == tgt, shifted, 0.0)               # (TN, C)

    if use_mxu_reduce:
        # Row reductions on the idle MXU; precision=HIGHEST keeps f32 accuracy.
        ones_vec = jnp.ones((c, 1), jnp.float32)
        sum_exp = jnp.dot(p, ones_vec, preferred_element_type=jnp.float32,
                          precision=jax.lax.Precision.HIGHEST)
        tgt_shifted = jnp.dot(masked, ones_vec,
                              preferred_element_type=jnp.float32,
                              precision=jax.lax.Precision.HIGHEST)
    else:
        sum_exp = jnp.sum(p, axis=-1, keepdims=True)               # XLU
        tgt_shifted = jnp.sum(masked, axis=-1, keepdims=True)      # XLU

    ce_rows = jnp.log(sum_exp) - tgt_shifted                       # (TN, 1)

    # Mask rows past the true batch size.  Covers (a) the ragged last tile
    # (block overhangs N) and (b) fully clamped duplicate tiles when the
    # splits x steps grid overhangs the tile count.  The mask MUST precede the
    # accumulate so garbage rows contribute exactly 0 (NaNs from uninitialized
    # data are discarded by the select).
    tile_idx = pl.program_id(0) * steps_per_split + step
    row_ids = tile_idx * tn + jax.lax.broadcasted_iota(jnp.int32, (tn, 1), 0)
    ce_rows = jnp.where(row_ids < n_total, ce_rows, 0.0)

    acc_ref[0] += jnp.sum(ce_rows)

    @pl.when(step == pl.num_programs(1) - 1)
    def _write_partial():
        # Per-split partial CE sum broadcast into this split's lane-dense
        # (1, 8, 128) output block; wrapper reads element [s, 0, 0].
        o_ref[...] = jnp.zeros(o_ref.shape, jnp.float32) + acc_ref[0]


def _choose_row_tile(n, c, itemsize, row_block, budget_bytes):
    """Rows per tile: VMEM-budgeted, rounded to the dtype's sublane packing."""
    row_pack = {4: 8, 2: 16, 1: 32}.get(itemsize, 8)
    if row_block is None:
        row_block = max(row_pack, budget_bytes // max(1, c * itemsize))
        row_block = min(row_block, n)
    # Round up to the packing granularity (block may overhang N; rows masked).
    return max(row_pack, ((row_block + row_pack - 1) // row_pack) * row_pack)


def focal_loss(preds, targets, *, alpha=0.5, gamma=3, row_block=None,
               num_splits=2, tile_budget_bytes=6 * 1024 * 1024,
               use_mxu_reduce=None):
    """preds: (N, C) float logits (f32 or bf16); targets: (N,) int class ids."""
    n, c = preds.shape
    itemsize = jnp.dtype(preds.dtype).itemsize
    tn = _choose_row_tile(n, c, itemsize, row_block, tile_budget_bytes)
    total_tiles = pl.cdiv(n, tn)

    # Leading "parallel" axis: shards the batch stream across TensorCores on
    # v7x; harmless sequential outer loop on single-TC chips (v5e/v6e).
    num_splits = max(1, min(num_splits, total_tiles))
    steps = pl.cdiv(total_tiles, num_splits)
    grid = (num_splits, steps)

    if use_mxu_reduce is None:
        # For C <= 128 the lane reduce is a single-vreg XLU pass; MXU offload
        # only pays once the reduction spans multiple vregs.
        use_mxu_reduce = c >= 128

    targets_2d = targets.astype(jnp.int32).reshape(n, 1)

    def tile_map(s, i):
        # Clamp so the (splits x steps) grid never indexes past the last tile;
        # the kernel's row mask zeroes the duplicate tile's contribution.
        return (jnp.minimum(s * steps + i, total_tiles - 1), 0)

    tile_native = tn * c * itemsize
    tile_f32 = tn * c * 4
    # 2x double-buffered native logits tiles + targets + headroom for Mosaic's
    # f32 elementwise intermediates; capped at 48 MiB so it fits v7x's 64 MiB
    # physical VMEM (v5e/v6e have 128 MiB, so the cap is safe everywhere).
    vmem_limit = 2 * tile_native + 4 * tn * 4 + 5 * tile_f32 + (2 << 20)
    vmem_limit = int(min(48 << 20, max(16 << 20, vmem_limit)))

    cost = pl.CostEstimate(
        flops=8 * n * c,
        transcendentals=n * c + n,
        bytes_accessed=n * c * itemsize + n * 4 + num_splits * 8 * 128 * 4,
    )

    partials = pl.pallas_call(
        functools.partial(_focal_ce_partial_kernel, n_total=n,
                          steps_per_split=steps,
                          use_mxu_reduce=use_mxu_reduce),
        out_shape=jax.ShapeDtypeStruct((num_splits, 8, 128), jnp.float32),
        grid_spec=pltpu.PrefetchScalarGridSpec(
            num_scalar_prefetch=0,
            grid=grid,
            in_specs=[
                pl.BlockSpec((tn, c), tile_map),   # logits tile (native dtype)
                pl.BlockSpec((tn, 1), tile_map),   # target ids tile
            ],
            out_specs=pl.BlockSpec((1, 8, 128), lambda s, i: (s, 0, 0)),
            scratch_shapes=[pltpu.SMEM((1,), jnp.float32)],
        ),
        compiler_params=pltpu.CompilerParams(
            dimension_semantics=("parallel", "arbitrary"),
            vmem_limit_bytes=vmem_limit,
        ),
        cost_estimate=cost,
    )(preds, targets_2d)

    # Mean + focal epilogue in the JAX wrapper (a handful of scalar ops).
    ce = jnp.sum(partials[:, 0, 0]) / jnp.float32(n)
    pt = jnp.exp(-ce)
    return jnp.float32(alpha) * (1.0 - pt) ** gamma * ce


def _focal_loss_ref(preds, targets, *, alpha=0.5, gamma=3):
    """Pure-JAX reference mirroring the PyTorch module."""
    logp = jax.nn.log_softmax(preds.astype(jnp.float32), axis=-1)
    nll = -jnp.take_along_axis(logp, targets.reshape(-1, 1), axis=-1)[:, 0]
    ce = jnp.mean(nll)
    pt = jnp.exp(-ce)
    return alpha * (1.0 - pt) ** gamma * ce


if __name__ == "__main__":
    key = jax.random.PRNGKey(0)
    k1, k2, k3, k4 = jax.random.split(key, 4)

    # Small-C case consistent with FocalLoss.forward: (N, C) logits, (N,) ids.
    # N deliberately not a multiple of the tile so the ragged-row mask is used.
    N, C = 37, 16
    preds = jax.random.normal(k1, (N, C), dtype=jnp.float32)
    targets = jax.random.randint(k2, (N,), 0, C, dtype=jnp.int32)

    # Multi-tile, dual-split path (grid (2, 3): clamped duplicate tile + ragged
    # last tile) and the auto-tiled single-tile path.
    loss_tiled = focal_loss(preds, targets, alpha=0.5, gamma=3, row_block=8)
    loss_auto = focal_loss(preds, targets, alpha=0.5, gamma=3)
    jax.block_until_ready((loss_tiled, loss_auto))
    ref = _focal_loss_ref(preds, targets, alpha=0.5, gamma=3)
    assert jnp.allclose(loss_tiled, ref, rtol=1e-5, atol=1e-6), (loss_tiled, ref)
    assert jnp.allclose(loss_auto, ref, rtol=1e-5, atol=1e-6), (loss_auto, ref)

    # bf16 logits stream straight from HBM (no wrapper upcast); f32 math inside.
    preds_bf16 = preds.astype(jnp.bfloat16)
    loss_bf16 = focal_loss(preds_bf16, targets, alpha=0.5, gamma=3)
    ref_bf16 = _focal_loss_ref(preds_bf16, targets, alpha=0.5, gamma=3)
    jax.block_until_ready(loss_bf16)
    assert jnp.allclose(loss_bf16, ref_bf16, rtol=1e-3, atol=1e-4), (loss_bf16, ref_bf16)

    # Larger class count exercises the MXU row-reduction path (C >= 128) with
    # the dual-split grid and a ragged last tile.  Tolerance allows for MXU
    # rounding of the row reductions.
    N2, C2 = 300, 256
    preds2 = jax.random.normal(k3, (N2, C2), dtype=jnp.float32)
    targets2 = jax.random.randint(k4, (N2,), 0, C2, dtype=jnp.int32)
    loss_mxu = focal_loss(preds2, targets2, alpha=0.5, gamma=3, row_block=64)
    jax.block_until_ready(loss_mxu)
    ref2 = _focal_loss_ref(preds2, targets2, alpha=0.5, gamma=3)
    assert jnp.allclose(loss_mxu, ref2, rtol=1e-3, atol=1e-4), (loss_mxu, ref2)

    print("KERNEL_OK")
</pallas_src>

<mosaic_0001>
module attributes {stable_mosaic.version = 11 : i64} {
  func.func @_focal_ce_partial_kernel(%arg0: i32, %arg1: i32, %arg2: memref<8x16xf32, #tpu.memory_space<vmem>>, %arg3: memref<8x1xi32, #tpu.memory_space<vmem>>, %arg4: memref<1x8x128xf32, #tpu.memory_space<vmem>>, %arg5: memref<1xf32, #tpu.memory_space<smem>>) attributes {dimension_semantics = [#tpu.dimension_semantics<parallel>, #tpu.dimension_semantics<arbitrary>], iteration_bounds = array<i64: 2, 3>, scalar_prefetch = 0 : i64, scratch_operands = 1 : i64, tpu.core_type = #tpu.core_type<tc>, window_params = [{transform_indices = @transform_0, window_bounds = array<i64: 8, 16>}, {transform_indices = @transform_1, window_bounds = array<i64: 8, 1>}, {transform_indices = @transform_2, window_bounds = array<i64: 1, 8, 128>}]} {
    %c0_i32 = arith.constant 0 : i32
    %0 = arith.cmpi eq, %arg1, %c0_i32 : i32
    %1 = arith.extui %0 : i1 to i32
    %c0_i32_0 = arith.constant 0 : i32
    %2 = arith.cmpi ne, %1, %c0_i32_0 : i32
    scf.if %2 {
      %cst_12 = arith.constant 0.000000e+00 : f32
      %c0_13 = arith.constant 0 : index
      %42 = memref.load %arg5[%c0_13] : memref<1xf32, #tpu.memory_space<smem>>
      memref.store %cst_12, %arg5[%c0_13] : memref<1xf32, #tpu.memory_space<smem>>
    } else {
    }
    %c0 = arith.constant 0 : index
    %c0_1 = arith.constant 0 : index
    %3 = vector.load %arg2[%c0, %c0_1] : memref<8x16xf32, #tpu.memory_space<vmem>>, vector<8x16xf32>
    %c0_2 = arith.constant 0 : index
    %c0_3 = arith.constant 0 : index
    %4 = vector.load %arg3[%c0_2, %c0_3] : memref<8x1xi32, #tpu.memory_space<vmem>>, vector<8x1xi32>
    %cst = arith.constant dense<0xFF800000> : vector<8xf32>
    %5 = vector.multi_reduction <maximumf>, %3, %cst [1] : vector<8x16xf32> to vector<8xf32>
    %6 = vector.shape_cast %5 : vector<8xf32> to vector<8x1xf32>
    %7 = vector.broadcast %6 : vector<8x1xf32> to vector<8x16xf32>
    %8 = arith.subf %3, %7 : vector<8x16xf32>
    %9 = math.exp %8 : vector<8x16xf32>
    %10 = tpu.iota {dimensions = array<i32: 1>} : vector<1x16xi32>
    %11 = vector.broadcast %10 : vector<1x16xi32> to vector<8x16xi32>
    %12 = vector.broadcast %4 : vector<8x1xi32> to vector<8x16xi32>
    %13 = arith.cmpi eq, %11, %12 : vector<8x16xi32>
    %cst_4 = arith.constant 0.000000e+00 : f32
    %14 = vector.broadcast %cst_4 : f32 to vector<8x16xf32>
    %15 = arith.select %13, %8, %14 : vector<8x16xi1>, vector<8x16xf32>
    %cst_5 = arith.constant dense<0.000000e+00> : vector<8xf32>
    %16 = vector.multi_reduction <add>, %9, %cst_5 [1] : vector<8x16xf32> to vector<8xf32>
    %17 = vector.shape_cast %16 : vector<8xf32> to vector<8x1xf32>
    %cst_6 = arith.constant dense<0.000000e+00> : vector<8xf32>
    %18 = vector.multi_reduction <add>, %15, %cst_6 [1] : vector<8x16xf32> to vector<8xf32>
    %19 = vector.shape_cast %18 : vector<8xf32> to vector<8x1xf32>
    %20 = math.log %17 : vector<8x1xf32>
    %21 = arith.subf %20, %19 : vector<8x1xf32>
    %c3_i32 = arith.constant 3 : i32
    %22 = arith.muli %arg0, %c3_i32 : i32
    %23 = arith.addi %22, %arg1 : i32
    %c8_i32 = arith.constant 8 : i32
    %24 = arith.muli %23, %c8_i32 : i32
    %25 = tpu.iota {dimensions = array<i32: 0>} : vector<8x1xi32>
    %26 = vector.broadcast %24 : i32 to vector<8x1xi32>
    %27 = arith.addi %26, %25 : vector<8x1xi32>
    %c37_i32 = arith.constant 37 : i32
    %28 = vector.broadcast %c37_i32 : i32 to vector<8x1xi32>
    %29 = arith.cmpi slt, %27, %28 : vector<8x1xi32>
    %cst_7 = arith.constant 0.000000e+00 : f32
    %30 = vector.broadcast %cst_7 : f32 to vector<8x1xf32>
    %31 = arith.select %29, %21, %30 : vector<8x1xi1>, vector<8x1xf32>
    %c0_8 = arith.constant 0 : index
    %32 = memref.load %arg5[%c0_8] : memref<1xf32, #tpu.memory_space<smem>>
    %33 = vector.shape_cast %31 : vector<8x1xf32> to vector<1x8x1xf32>
    %cst_9 = arith.constant dense<0.000000e+00> : vector<1xf32>
    %34 = vector.multi_reduction <add>, %33, %cst_9 [1, 2] : vector<1x8x1xf32> to vector<1xf32>
    %35 = vector.shape_cast %34 : vector<1xf32> to vector<1x1x1xf32>
    %36 = vector.extract %35[0, 0, 0] : f32 from vector<1x1x1xf32>
    %37 = arith.addf %32, %36 : f32
    %c0_10 = arith.constant 0 : index
    %38 = memref.load %arg5[%c0_10] : memref<1xf32, #tpu.memory_space<smem>>
    memref.store %37, %arg5[%c0_10] : memref<1xf32, #tpu.memory_space<smem>>
    %c2_i32 = arith.constant 2 : i32
    %39 = arith.cmpi eq, %arg1, %c2_i32 : i32
    %40 = arith.extui %39 : i1 to i32
    %c0_i32_11 = arith.constant 0 : i32
    %41 = arith.cmpi ne, %40, %c0_i32_11 : i32
    scf.if %41 {
      %cst_12 = arith.constant 0.000000e+00 : f32
      %42 = vector.broadcast %cst_12 : f32 to vector<1x8x128xf32>
      %c0_13 = arith.constant 0 : index
      %43 = memref.load %arg5[%c0_13] : memref<1xf32, #tpu.memory_space<smem>>
      %44 = vector.broadcast %43 : f32 to vector<1x8x128xf32>
      %45 = arith.addf %42, %44 : vector<1x8x128xf32>
      %c0_14 = arith.constant 0 : index
      %c0_15 = arith.constant 0 : index
      %c0_16 = arith.constant 0 : index
      %46 = vector.load %arg4[%c0_14, %c0_15, %c0_16] : memref<1x8x128xf32, #tpu.memory_space<vmem>>, vector<1x8x128xf32>
      tpu.vector_store %arg4[%c0_14, %c0_15, %c0_16], %45 {strides = array<i32>} : memref<1x8x128xf32, #tpu.memory_space<vmem>>, vector<1x8x128xf32>,
    } else {
    }
    return
  }
  func.func @transform_0(%arg0: i32, %arg1: i32) -> (i32, i32) {
    %c3_i32 = arith.constant 3 : i32
    %0 = arith.muli %arg0, %c3_i32 : i32
    %1 = arith.addi %0, %arg1 : i32
    %c4_i32 = arith.constant 4 : i32
    %2 = arith.minsi %1, %c4_i32 : i32
    %c0_i32 = arith.constant 0 : i32
    %c0_i32_0 = arith.constant 0 : i32
    return %2, %c0_i32 : i32, i32
  }
  func.func @transform_1(%arg0: i32, %arg1: i32) -> (i32, i32) {
    %c3_i32 = arith.constant 3 : i32
    %0 = arith.muli %arg0, %c3_i32 : i32
    %1 = arith.addi %0, %arg1 : i32
    %c4_i32 = arith.constant 4 : i32
    %2 = arith.minsi %1, %c4_i32 : i32
    %c0_i32 = arith.constant 0 : i32
    %c0_i32_0 = arith.constant 0 : i32
    return %2, %c0_i32 : i32, i32
  }
  func.func @transform_2(%arg0: i32, %arg1: i32) -> (i32, i32, i32) {
    %c0_i32 = arith.constant 0 : i32
    %c0_i32_0 = arith.constant 0 : i32
    %c0_i32_1 = arith.constant 0 : i32
    return %arg0, %c0_i32, %c0_i32_0 : i32, i32, i32
  }
}

</mosaic_0001>

<llo_original>
// kernel: tpu_custom_call.1
$region0: #{tpu_custom_call.1}
  #allocation0 [shape = 'u32[]', space=smem, size = 0x4, offset = 0x4, fixed_abs, tag = 'smem constant byte address 0x4 - core index']
  #allocation1 [shape = 'u32[144,128]{1,0:T(1,128)}', space=vmem, size = 0x12000, scoped, tag = 'internal scratch']
  #allocation2 [shape = 'f32[1]{0:T(128)}', space=smem, size = 0x200, scoped, tag = 'scratch operand']
  %s0 = inlined_call_operand.vmem [shape: f32[37,16], index: 0, kind: input, shape index: {}]
  %s1 = inlined_call_operand.vmem [shape: s32[37,1], index: 1, kind: input, shape index: {}]
  %s2 = inlined_call_operand.hbm [shape: f32[2,8,128], index: 2, kind: output, shape index: {}]
  %s3 = sld [smem:[#allocation0]]
  $region49: #{tpu_custom_call.1} parent=0
    _
  %s5 = ssub.s32 1, %s3
  %s6 = scalar_select 0, %s5, %s3
  $region1: #{tpu_custom_call.1} parent=0
    #allocation3 [shape = 'u8[8192]{0}', space=vmem, size = 0x2000, scoped, tag = 'output window, operand 0']
    #allocation4 [shape = 's32[2]{0}', space=sflag, size = 0x8, scoped, tag = 'scoped memory for tpu_custom_call.1']
    %7 = vsyncpa [#allocation4], 0
    %s8 = scalar_lea.sflag [#allocation4], 1
    %9 = vsyncpa %s8, 0
    loop: start=0, step=1, limit=8
    $region2: #{tpu_custom_call.1} parent=1 // loop_pre_header
      _
    $region3: #{tpu_custom_call.1} parent=1 // loop_header
      %s11 = sphi 0, %s15
      %p12 = scmp.ge.s32.totalorder %s11, 8
      %s18 = sphi 0, %s30
      %s19 = sphi 0, %s26
      %s20 = sphi 0, %s18
      %s21 = sphi 0, %s19
      %s22 = sphi 0, %s20
      %s23 = sphi 0, %s21
      %s41 = sphi 0, %s43
      %s44 = sphi 0, %s41
      %s45 = sphi 0, %s44
      %s61 = sphi 0, %s45
      %s75 = sphi 0, %s77
      %s78 = sphi 0, %s75
      %s79 = sphi 0, %s78
      %s95 = sphi 0, %s79
      %s101 = sphi 0, %s103
      %s104 = sphi 0, %s101
      %s105 = sphi 0, %s104
      %s121 = sphi 0, %s105
    $region4: #{tpu_custom_call.1} parent=1 // loop_header_branch
      %14 = sbr.rel (%p12) target = $region8
    $region5: #{tpu_custom_call.1} parent=1 // loop_body
      %s16 = ssub.s32 %s11, 1
      %s17 = ssub.s32 %s11, 2
      %s24 = sadd.s32 1, %s19
      %p25 = scmp.ge.s32.totalorder %s24, 3
      %s26 = scalar_select %p25, 0, %s24
      %s27 = sadd.s32 1, %s18
      %s28 = scalar_select %p25, %s27, %s18
      %p29 = scmp.ge.s32.totalorder %s28, 2
      %s30 = scalar_select %p29, 0, %s28
      %s31 = smul.u32 %s18, 3
      %s32 = sadd.s32 %s31, %s19
      %p33 = scmp.lt.s32.totalorder %s32, 4
      %s34 = scalar_select %p33, %s32, 4
      %s35 = smul.u32 %s30, 3
      %s36 = sadd.s32 %s35, %s26
      %p37 = scmp.lt.s32.totalorder %s36, 4
      %s38 = scalar_select %p37, %s36, 4
      %s39 = ssub.s32 %s34, %s38
      %p40 = scmp.eq.s32.totalorder %s39, 0
      %s42 = sadd.s32 %s41, 1
      %s43 = scalar_select %p40, %s41, %s42
      %p46 = pneg %p40
      %p47 = scmp.eq.s32.totalorder %s11, 5
      %p48 = por %p46, %p47
      %p49 = scmp.ne.s32.totalorder %s41, %s44
      %p50 = scmp.eq.s32.totalorder %s11, 0
      %p51 = por %p49, %p50
      %p52 = scmp.ne.s32.totalorder %s41, %s44
      %p53 = scmp.eq.s32.totalorder %s16, 5
      %p54 = por %p52, %p53
      %p55 = scmp.ne.s32.totalorder %s44, %s45
      %p56 = scmp.eq.s32.totalorder %s16, 0
      %p57 = por %p55, %p56
      %p58 = scmp.ne.s32.totalorder %s44, %s45
      %p59 = scmp.eq.s32.totalorder %s17, 5
      %p60 = por %p58, %p59
      %p62 = scmp.ne.s32.totalorder %s45, %s61
      %p63 = scmp.eq.s32.totalorder %s17, 0
      %p64 = por %p62, %p63
      %s65 = smul.u32 %s18, 3
      %s66 = sadd.s32 %s65, %s19
      %p67 = scmp.lt.s32.totalorder %s66, 4
      %s68 = scalar_select %p67, %s66, 4
      %s69 = smul.u32 %s30, 3
      %s70 = sadd.s32 %s69, %s26
      %p71 = scmp.lt.s32.totalorder %s70, 4
      %s72 = scalar_select %p71, %s70, 4
      %s73 = ssub.s32 %s68, %s72
      %p74 = scmp.eq.s32.totalorder %s73, 0
      %s76 = sadd.s32 %s75, 1
      %s77 = scalar_select %p74, %s75, %s76
      %p80 = pneg %p74
      %p81 = scmp.eq.s32.totalorder %s11, 5
      %p82 = por %p80, %p81
      %p83 = scmp.ne.s32.totalorder %s75, %s78
      %p84 = scmp.eq.s32.totalorder %s11, 0
      %p85 = por %p83, %p84
      %p86 = scmp.ne.s32.totalorder %s75, %s78
      %p87 = scmp.eq.s32.totalorder %s16, 5
      %p88 = por %p86, %p87
      %p89 = scmp.ne.s32.totalorder %s78, %s79
      %p90 = scmp.eq.s32.totalorder %s16, 0
      %p91 = por %p89, %p90
      %p92 = scmp.ne.s32.totalorder %s78, %s79
      %p93 = scmp.eq.s32.totalorder %s17, 5
      %p94 = por %p92, %p93
      %p96 = scmp.ne.s32.totalorder %s79, %s95
      %p97 = scmp.eq.s32.totalorder %s17, 0
      %p98 = por %p96, %p97
      %s99 = ssub.s32 %s18, %s30
      %p100 = scmp.eq.s32.totalorder %s99, 0
      %s102 = sadd.s32 %s101, 1
      %s103 = scalar_select %p100, %s101, %s102
      %p106 = pneg %p100
      %p107 = scmp.eq.s32.totalorder %s11, 5
      %p108 = por %p106, %p107
      %p109 = scmp.ne.s32.totalorder %s101, %s104
      %p110 = scmp.eq.s32.totalorder %s11, 0
      %p111 = por %p109, %p110
      %p112 = scmp.ne.s32.totalorder %s101, %s104
      %p113 = scmp.eq.s32.totalorder %s16, 5
      %p114 = por %p112, %p113
      %p115 = scmp.ne.s32.totalorder %s104, %s105
      %p116 = scmp.eq.s32.totalorder %s16, 0
      %p117 = por %p115, %p116
      %p118 = scmp.ne.s32.totalorder %s104, %s105
      %p119 = scmp.eq.s32.totalorder %s17, 5
      %p120 = por %p118, %p119
      %p122 = scmp.ne.s32.totalorder %s105, %s121
      %p123 = scmp.eq.s32.totalorder %s17, 0
      %p124 = por %p122, %p123
      %p125 = scmp.le.s32.totalorder 1, %s11
      %p126 = scmp.lt.s32.totalorder %s11, 7
      %p127 = pnand %p125, %p126
      %p128 = pneg %p127
      // Predicated region
      $region9: #{tpu_custom_call.1} parent=5 // pred_check
        _
      $region10: #{tpu_custom_call.1} parent=5 // pred_check_branch
        %130 = sbr.rel (%p127) target = $region12
      $region11: #{tpu_custom_call.1} parent=5 // pred_region
        %s131 = ssub.s32 %s11, 1
      $region12: #{tpu_custom_call.1} parent=5 // pred_fallthru
        _
      %p132 = scmp.lt.s32.totalorder %s11, 6
      // Predicated region
      $region13: #{tpu_custom_call.1} parent=5 // pred_check
        %p133 = pneg %p132
      $region14: #{tpu_custom_call.1} parent=5 // pred_check_branch
        %135 = sbr.rel (%p133) target = $region16
      $region15: #{tpu_custom_call.1} parent=5 // pred_region
        // Predicated region
        $region17: #{tpu_custom_call.1} parent=15 // pred_check
          %p136 = pneg %p51
        $region18: #{tpu_custom_call.1} parent=15 // pred_check_branch
          %138 = sbr.rel (%p136) target = $region20
        $region19: #{tpu_custom_call.1} parent=15 // pred_region
          %s139 = smul.u32 %s18, 3
          %s140 = sadd.s32 %s139, %s19
          %p141 = scmp.lt.s32.totalorder %s140, 4
          %s142 = scalar_select %p141, %s140, 4
          %p143 = scmp.lt.s32.totalorder %s142, 4
          %s144 = scalar_select %p143, %s142, 4
          %s145 = smul.addr %s144, 8
          %s146 = scalar_lea.vmem %s0, %s145
          %s147 = smul.u32 %s18, 3
          %s148 = sadd.s32 %s147, %s19
          %p149 = scmp.lt.s32.totalorder %s148, 4
          %s150 = scalar_select %p149, %s148, 4
        $region20: #{tpu_custom_call.1} parent=15 // pred_fallthru
          _
        // Predicated region
        $region21: #{tpu_custom_call.1} parent=15 // pred_check
          %p151 = pneg %p85
        $region22: #{tpu_custom_call.1} parent=15 // pred_check_branch
          %153 = sbr.rel (%p151) target = $region24
        $region23: #{tpu_custom_call.1} parent=15 // pred_region
          %s154 = smul.u32 %s18, 3
          %s155 = sadd.s32 %s154, %s19
          %p156 = scmp.lt.s32.totalorder %s155, 4
          %s157 = scalar_select %p156, %s155, 4
          %p158 = scmp.lt.s32.totalorder %s157, 4
          %s159 = scalar_select %p158, %s157, 4
          %s160 = smul.addr %s159, 8
          %s161 = scalar_lea.vmem %s1, %s160
          %s162 = smul.u32 %s18, 3
          %s163 = sadd.s32 %s162, %s19
          %p164 = scmp.lt.s32.totalorder %s163, 4
          %s165 = scalar_select %p164, %s163, 4
        $region24: #{tpu_custom_call.1} parent=15 // pred_fallthru
          _
      $region16: #{tpu_custom_call.1} parent=5 // pred_fallthru
        _
      %p166 = scmp.le.s32.totalorder 1, %s11
      %p167 = scmp.lt.s32.totalorder %s11, 7
      %p168 = pnand %p166, %p167
      %p169 = pneg %p168
      // Predicated region
      $region25: #{tpu_custom_call.1} parent=5 // pred_check
        _
      $region26: #{tpu_custom_call.1} parent=5 // pred_check_branch
        %171 = sbr.rel (%p168) target = $region28
      $region27: #{tpu_custom_call.1} parent=5 // pred_region
        %s172 = ssub.s32 %s11, 1
        %s173 = smul.u32 %s20, 3
        %s174 = sadd.s32 %s173, %s21
        %p175 = scmp.lt.s32.totalorder %s174, 4
        %s176 = scalar_select %p175, %s174, 4
        %p177 = scmp.lt.s32.totalorder %s176, 4
        %s178 = scalar_select %p177, %s176, 4
        %s179 = smul.addr %s178, 8
        %s180 = scalar_lea.vmem %s0, %s179
        %p181 = pneg %p57
        %p182 = pneg %p54
        %s183 = smul.u32 %s20, 3
        %s184 = sadd.s32 %s183, %s21
        %p185 = scmp.lt.s32.totalorder %s184, 4
        %s186 = scalar_select %p185, %s184, 4
        %p187 = scmp.lt.s32.totalorder %s186, 4
        %s188 = scalar_select %p187, %s186, 4
        %s189 = smul.addr %s188, 8
        %s190 = scalar_lea.vmem %s1, %s189
        %p191 = pneg %p91
        %p192 = pneg %p88
        %p193 = pneg %p117
        %p194 = pneg %p114
        %s195 = sand.u32 %s104, 1
        %s196 = scalar_lea.sflag [#allocation4], %s195
        %s197 = sand.u32 %s104, 1
        %s198 = smul.addr %s197, 8
        %s199 = scalar_lea.vmem [#allocation3], %s198
        %s200 = smul.u32 %s20, 3
        %s201 = sadd.s32 %s200, %s21
        %p202 = scmp.lt.s32.totalorder %s201, 4
        %s203 = scalar_select %p202, %s201, 4
        %p204 = scmp.lt.s32.totalorder %s203, 4
        %s205 = scalar_select %p204, %s203, 4
        %s206 = smul.addr %s205, 8
        %s207 = scalar_lea.vmem %s0, %s206
        %s208 = smul.u32 %s20, 3
        %s209 = sadd.s32 %s208, %s21
        %p210 = scmp.lt.s32.totalorder %s209, 4
        %s211 = scalar_select %p210, %s209, 4
        %s212 = smul.u32 %s20, 3
        %s213 = sadd.s32 %s212, %s21
        %p214 = scmp.lt.s32.totalorder %s213, 4
        %s215 = scalar_select %p214, %s213, 4
        %p216 = scmp.lt.s32.totalorder %s215, 4
        %s217 = scalar_select %p216, %s215, 4
        %s218 = smul.addr %s217, 8
        %s219 = scalar_lea.vmem %s1, %s218
        %s220 = smul.u32 %s20, 3
        %s221 = sadd.s32 %s220, %s21
        %p222 = scmp.lt.s32.totalorder %s221, 4
        %s223 = scalar_select %p222, %s221, 4
        %p224 = scmp.eq.s32.totalorder %s21, 0
        // Predicated region
        $region29: #{tpu_custom_call.1} parent=27 // pred_check
          %p225 = pneg %p224
        $region30: #{tpu_custom_call.1} parent=27 // pred_check_branch
          %227 = sbr.rel (%p225) target = $region32
        $region31: #{tpu_custom_call.1} parent=27 // pred_region
          %s228 = scalar_lea.smem [#allocation2], 0
          %229 = sst [smem:[%s228]] 0.0
        $region32: #{tpu_custom_call.1} parent=27 // pred_fallthru
          _
        %v230 = vld [vmem:[%s207] sm:$0xff]
        %v231 = vld [vmem:[%s219] sm:$0xff]
        %vm232 = vcmask 130048
        %v233 = vsel %vm232, %v230, -inf
        %234 = vmax.xlane.f32.xlu0 %v233
        %v235 = vpop.xlane.xlu0 %234
        %v236 = vsub.f32 %v230, %v235
        %v237 = vmul.f32 %v236, 1.442695
        %v238 = vpow.pop %v237
        %v239 = vlaneseq
        %v240 = vand.u32 %v239, 127
        %241 = vset.pattern.permute.xlu0 0
        %242 = vperm.xlu0 %241, %v231
        %v243 = vpop.permute.xlu0 %242
        %vm244 = vcmp.eq.s32.totalorder %v240, %v243
        %v245 = vsel %vm244, %v236, 0.0
        %v246 = vsel %vm232, %v238, 0.0
        %247 = vadd.xlane.f32.xlu0 %v246
        %v248 = vpop.xlane.xlu0 %247
        %v249 = vsel %vm232, %v245, 0.0
        %250 = vadd.xlane.f32.xlu0 %v249
        %v251 = vpop.xlane.xlu0 %250
        %v252 = vlog2.pop %v248
        %v253 = vmul.f32 %v252, 0.6931472
        %v254 = vsub.f32 %v253, %v251
        %s255 = smul.u32 %s20, 3
        %s256 = sadd.s32 %s255, %s21
        %s257 = smul.u32 %s256, 8
        %v258 = vlaneseq
        %v259 = vshrl.u32 %v258, 7
        %v260 = vstv %s257
        %v261 = vadd.s32 %v260, %v259
        %vm262 = vcmp.lt.s32.totalorder %v261, 37
        %v263 = vsel %vm262, %v254, 0.0
        %s264 = sld [smem:[#allocation2]]
        %vm265 = vcmask 7168
        %v266 = vsel %vm265, %v263, 0.0
        %267 = vadd.xlane.f32.xlu0 %v266
        %v268 = vpop.xlane.xlu0 %267
        %v269 = vrot.slane %v268, 4
        %v270 = vadd.f32 %v268, %v269
        %v271 = vrot.slane %v270, 2
        %v272 = vadd.f32 %v270, %v271
        %v273 = vrot.slane %v272, 1
        %v274 = vadd.f32 %v272, %v273
        %s275 = vtos %v274
        %s276 = sadd.f32 %s264, %s275
        %s277 = scalar_lea.smem [#allocation2], 0
        %278 = sst [smem:[%s277]] %s276
        %p279 = scmp.eq.s32.totalorder %s21, 2
        // Predicated region
        $region33: #{tpu_custom_call.1} parent=27 // pred_check
          %p280 = pneg %p279
        $region34: #{tpu_custom_call.1} parent=27 // pred_check_branch
          %282 = sbr.rel (%p280) target = $region36
        $region35: #{tpu_custom_call.1} parent=27 // pred_region
          %s283 = sld [smem:[#allocation2]]
          %v284 = vstv %s283
          %v285 = vadd.f32 %v284, 0.0
          %286 = vst [vmem:[%s199] sm:$0xff] %v285
        $region36: #{tpu_custom_call.1} parent=27 // pred_fallthru
          _
        %s287 = sand.u32 %s104, 1
        %s288 = scalar_lea.sflag [#allocation4], %s287
        %s289 = sand.u32 %s104, 1
        %s290 = smul.addr %s289, 8
        %s291 = scalar_lea.vmem [#allocation3], %s290
        // Predicated region
        $region37: #{tpu_custom_call.1} parent=27 // pred_check
          %p292 = pneg %p114
        $region38: #{tpu_custom_call.1} parent=27 // pred_check_branch
          %294 = sbr.rel (%p292) target = $region40
        $region39: #{tpu_custom_call.1} parent=27 // pred_region
          %s296 = ssub.s32 128, 128
          %297 = vsyncadd %s288, %s296
          %s298 = smul.addr %s20, 128
          %s299 = scalar_lea.hbm %s2, %s298
          %s301 = sshll.u32 %s291, 4
          %s302 = int_to_ptr.vmem [resolvable:$true] %s301
          %304 = dma.vmem_to_hbm [thread:$0]  %s302, 128, %s299, %s288
        $region40: #{tpu_custom_call.1} parent=27 // pred_fallthru
          _
      $region28: #{tpu_custom_call.1} parent=5 // pred_fallthru
        _
      %p305 = scmp.le.s32.totalorder 2, %s11
      // Predicated region
      $region41: #{tpu_custom_call.1} parent=5 // pred_check
        %p306 = pneg %p305
      $region42: #{tpu_custom_call.1} parent=5 // pred_check_branch
        %308 = sbr.rel (%p306) target = $region44
      $region43: #{tpu_custom_call.1} parent=5 // pred_region
        %s309 = ssub.s32 %s11, 2
        // Predicated region
        $region45: #{tpu_custom_call.1} parent=43 // pred_check
          %p310 = pneg %p120
        $region46: #{tpu_custom_call.1} parent=43 // pred_check_branch
          %312 = sbr.rel (%p310) target = $region48
        $region47: #{tpu_custom_call.1} parent=43 // pred_region
          %s313 = sand.u32 %s105, 1
          %s314 = scalar_lea.sflag [#allocation4], %s313
          %s315 = sand.u32 %s105, 1
          %s316 = smul.addr %s315, 8
          %s317 = scalar_lea.vmem [#allocation3], %s316
          %318 = dma.done %s314, 128
        $region48: #{tpu_custom_call.1} parent=43 // pred_fallthru
          _
      $region44: #{tpu_custom_call.1} parent=5 // pred_fallthru
        _
    $region6: #{tpu_custom_call.1} parent=1 // loop_footer
      %s15 = sadd.s32 1, %s11
    $region7: #{tpu_custom_call.1} parent=1 // loop_footer_branch
      %10 = sbr.rel target = $region3
    $region8: #{tpu_custom_call.1} parent=1 // loop_exit
      _
    %319 = vsyncpa [#allocation4], 1
    %s320 = scalar_lea.sflag [#allocation4], 1
    %321 = vsyncpa %s320, 1

</llo_original>
